<compile_context>
chip_gen: v7x
topology: tpu7x:2x2x1
jax: 0.10.0
libtpu: 0.0.40
codegen_flags: <defaults>
</compile_context>

<pallas_src>
import jax
import jax.numpy as jnp
from jax.experimental import pallas as pl
from jax.experimental.pallas import tpu as pltpu

TRIM_H = 28
TRIM_W = 28


def _trim_kernel(x_ref, o_ref):
    # x_ref block: (B, Hb, Wb) with Hb >= 28, Wb >= 28 (offset 0 slice only,
    # so no relayout is needed). o_ref block: (B, 28, 28).
    o_ref[...] = x_ref[:, :TRIM_H, :TRIM_W]


def trim(x, *, vmem_budget_bytes=8 * 1024 * 1024):
    """x: (N, C, H, W) with H >= 28, W >= 28 -> (N, C, 28, 28)."""
    N, C, H, W = x.shape
    assert H >= TRIM_H and W >= TRIM_W, "spatial dims must be >= 28"

    NC = N * C
    x2 = x.reshape(NC, H, W)  # free metadata reshape (contiguous NCHW)

    # Input tile: just enough rows/cols to cover the 28x28 window, aligned to
    # the (8, 128) layout grain, or full extent when the array is smaller.
    Hb = 32 if H >= 32 else H       # multiple of 8 (covers the 28 rows)
    Wb = 128 if W >= 128 else W     # lane-aligned (covers the 28 cols)

    itemsize = jnp.dtype(x.dtype).itemsize
    # Double-buffered input tile + double-buffered output tile per plane
    # (output tile pads to (32, 128) in VMEM).
    per_plane_bytes = 2 * Hb * Wb * itemsize + 2 * 32 * 128 * itemsize
    b_cap = max(1, vmem_budget_bytes // per_plane_bytes)
    # Keep at least ~4 grid steps so megacore sharding has work per core.
    B = int(max(1, min(b_cap, pl.cdiv(NC, 4))))
    grid = (pl.cdiv(NC, B),)

    out2 = pl.pallas_call(
        _trim_kernel,
        out_shape=jax.ShapeDtypeStruct((NC, TRIM_H, TRIM_W), x.dtype),
        grid_spec=pltpu.PrefetchScalarGridSpec(
            num_scalar_prefetch=0,
            grid=grid,
            in_specs=[
                pl.BlockSpec((B, Hb, Wb), lambda i: (i, 0, 0)),
            ],
            out_specs=pl.BlockSpec(
                (B, TRIM_H, TRIM_W), lambda i: (i, 0, 0)
            ),
        ),
        compiler_params=pltpu.CompilerParams(
            dimension_semantics=("parallel",),
        ),
    )(x2)

    return out2.reshape(N, C, TRIM_H, TRIM_W)


if __name__ == "__main__":
    key = jax.random.PRNGKey(0)
    # Small shape consistent with the module's requirement (spatial >= 28).
    x = jax.random.normal(key, (2, 4, 32, 32), dtype=jnp.float32)

    out = trim(x)
    out = jax.block_until_ready(out)

    # Correctness check against plain slicing.
    ref = x[:, :, :28, :28]
    assert out.shape == (2, 4, 28, 28), out.shape
    assert jnp.array_equal(out, ref), "mismatch vs reference slice"

    print("KERNEL_OK")
</pallas_src>

<mosaic_0001>
module attributes {stable_mosaic.version = 11 : i64} {
  func.func @_trim_kernel(%arg0: i32, %arg1: memref<2x32x32xf32, #tpu.memory_space<vmem>>, %arg2: memref<2x28x28xf32, #tpu.memory_space<vmem>>) attributes {dimension_semantics = [#tpu.dimension_semantics<parallel>], iteration_bounds = array<i64: 4>, scalar_prefetch = 0 : i64, scratch_operands = 0 : i64, tpu.core_type = #tpu.core_type<tc>, window_params = [{transform_indices = @transform_0, window_bounds = array<i64: 2, 32, 32>}, {transform_indices = @transform_1, window_bounds = array<i64: 2, 28, 28>}]} {
    %c0 = arith.constant 0 : index
    %c0_0 = arith.constant 0 : index
    %c0_1 = arith.constant 0 : index
    %0 = vector.load %arg1[%c0, %c0_0, %c0_1] : memref<2x32x32xf32, #tpu.memory_space<vmem>>, vector<2x28x28xf32>
    %c0_2 = arith.constant 0 : index
    %c0_3 = arith.constant 0 : index
    %c0_4 = arith.constant 0 : index
    %1 = vector.load %arg2[%c0_2, %c0_3, %c0_4] : memref<2x28x28xf32, #tpu.memory_space<vmem>>, vector<2x28x28xf32>
    tpu.vector_store %arg2[%c0_2, %c0_3, %c0_4], %0 {strides = array<i32>} : memref<2x28x28xf32, #tpu.memory_space<vmem>>, vector<2x28x28xf32>,
    return
  }
  func.func @transform_0(%arg0: i32) -> (i32, i32, i32) {
    %c0_i32 = arith.constant 0 : i32
    %c0_i32_0 = arith.constant 0 : i32
    %c0_i32_1 = arith.constant 0 : i32
    return %arg0, %c0_i32, %c0_i32_0 : i32, i32, i32
  }
  func.func @transform_1(%arg0: i32) -> (i32, i32, i32) {
    %c0_i32 = arith.constant 0 : i32
    %c0_i32_0 = arith.constant 0 : i32
    %c0_i32_1 = arith.constant 0 : i32
    return %arg0, %c0_i32, %c0_i32_0 : i32, i32, i32
  }
}

</mosaic_0001>

<llo_original>
// kernel: tpu_custom_call.1
$region0: #{tpu_custom_call.1}
  #allocation0 [shape = 'u32[]', space=smem, size = 0x4, offset = 0x4, fixed_abs, tag = 'smem constant byte address 0x4 - core index']
  #allocation1 [shape = 'u32[144,128]{1,0:T(1,128)}', space=vmem, size = 0x12000, scoped, tag = 'internal scratch']
  %s0 = inlined_call_operand.hbm [shape: f32[8,32,32], index: 0, kind: input, shape index: {}]
  %s1 = inlined_call_operand.vmem [shape: f32[8,28,28], index: 1, kind: output, shape index: {}]
  %s2 = sld [smem:[#allocation0]]
  $region41: #{tpu_custom_call.1} parent=0
    _
  %s4 = ssub.s32 1, %s2
  %s5 = scalar_select 0, %s4, %s2
  $region1: #{tpu_custom_call.1} parent=0
    #allocation2 [shape = 'u8[65536]{0}', space=vmem, size = 0x10000, scoped, tag = 'input window, operand 0']
    #allocation3 [shape = 's32[2]{0}', space=sflag, size = 0x8, scoped, tag = 'scoped memory for tpu_custom_call.1']
    %6 = vsyncpa [#allocation3], 0
    %s7 = scalar_lea.sflag [#allocation3], 1
    %8 = vsyncpa %s7, 0
    loop: start=0, step=1, limit=6
    $region2: #{tpu_custom_call.1} parent=1 // loop_pre_header
      _
    $region3: #{tpu_custom_call.1} parent=1 // loop_header
      %s10 = sphi 0, %s14
      %p11 = scmp.ge.s32.totalorder %s10, 6
      %s20 = sphi 0, %s22
      %s23 = sphi 0, %s20
      %s24 = sphi 0, %s23
      %s40 = sphi 0, %s24
      %s46 = sphi 0, %s48
      %s49 = sphi 0, %s46
      %s50 = sphi 0, %s49
      %s66 = sphi 0, %s50
    $region4: #{tpu_custom_call.1} parent=1 // loop_header_branch
      %13 = sbr.rel (%p11) target = $region8
    $region5: #{tpu_custom_call.1} parent=1 // loop_body
      %s15 = ssub.s32 %s10, 1
      %s16 = ssub.s32 %s10, 2
      %s17 = sadd.s32 %s10, 1
      %s18 = ssub.s32 %s10, %s17
      %p19 = scmp.eq.s32.totalorder %s18, 0
      %s21 = sadd.s32 %s20, 1
      %s22 = scalar_select %p19, %s20, %s21
      %p25 = pneg %p19
      %p26 = scmp.eq.s32.totalorder %s10, 3
      %p27 = por %p25, %p26
      %p28 = scmp.ne.s32.totalorder %s20, %s23
      %p29 = scmp.eq.s32.totalorder %s10, 0
      %p30 = por %p28, %p29
      %p31 = scmp.ne.s32.totalorder %s20, %s23
      %p32 = scmp.eq.s32.totalorder %s15, 3
      %p33 = por %p31, %p32
      %p34 = scmp.ne.s32.totalorder %s23, %s24
      %p35 = scmp.eq.s32.totalorder %s15, 0
      %p36 = por %p34, %p35
      %p37 = scmp.ne.s32.totalorder %s23, %s24
      %p38 = scmp.eq.s32.totalorder %s16, 3
      %p39 = por %p37, %p38
      %p41 = scmp.ne.s32.totalorder %s24, %s40
      %p42 = scmp.eq.s32.totalorder %s16, 0
      %p43 = por %p41, %p42
      %s44 = ssub.s32 %s10, %s17
      %p45 = scmp.eq.s32.totalorder %s44, 0
      %s47 = sadd.s32 %s46, 1
      %s48 = scalar_select %p45, %s46, %s47
      %p51 = pneg %p45
      %p52 = scmp.eq.s32.totalorder %s10, 3
      %p53 = por %p51, %p52
      %p54 = scmp.ne.s32.totalorder %s46, %s49
      %p55 = scmp.eq.s32.totalorder %s10, 0
      %p56 = por %p54, %p55
      %p57 = scmp.ne.s32.totalorder %s46, %s49
      %p58 = scmp.eq.s32.totalorder %s15, 3
      %p59 = por %p57, %p58
      %p60 = scmp.ne.s32.totalorder %s49, %s50
      %p61 = scmp.eq.s32.totalorder %s15, 0
      %p62 = por %p60, %p61
      %p63 = scmp.ne.s32.totalorder %s49, %s50
      %p64 = scmp.eq.s32.totalorder %s16, 3
      %p65 = por %p63, %p64
      %p67 = scmp.ne.s32.totalorder %s50, %s66
      %p68 = scmp.eq.s32.totalorder %s16, 0
      %p69 = por %p67, %p68
      %p70 = scmp.le.s32.totalorder 1, %s10
      %p71 = scmp.lt.s32.totalorder %s10, 5
      %p72 = pnand %p70, %p71
      %p73 = pneg %p72
      // Predicated region
      $region9: #{tpu_custom_call.1} parent=5 // pred_check
        _
      $region10: #{tpu_custom_call.1} parent=5 // pred_check_branch
        %75 = sbr.rel (%p72) target = $region12
      $region11: #{tpu_custom_call.1} parent=5 // pred_region
        %s76 = ssub.s32 %s10, 1
      $region12: #{tpu_custom_call.1} parent=5 // pred_fallthru
        _
      %p77 = scmp.lt.s32.totalorder %s10, 4
      // Predicated region
      $region13: #{tpu_custom_call.1} parent=5 // pred_check
        %p78 = pneg %p77
      $region14: #{tpu_custom_call.1} parent=5 // pred_check_branch
        %80 = sbr.rel (%p78) target = $region16
      $region15: #{tpu_custom_call.1} parent=5 // pred_region
        // Predicated region
        $region17: #{tpu_custom_call.1} parent=15 // pred_check
          %p81 = pneg %p30
        $region18: #{tpu_custom_call.1} parent=15 // pred_check_branch
          %83 = sbr.rel (%p81) target = $region20
        $region19: #{tpu_custom_call.1} parent=15 // pred_region
          %s84 = sand.u32 %s20, 1
          %s85 = scalar_lea.sflag [#allocation3], %s84
          %s86 = sand.u32 %s20, 1
          %s87 = smul.addr %s86, 64
          %s88 = scalar_lea.vmem [#allocation2], %s87
          %s89 = smul.u32 2, %s10
          %s91 = ssub.s32 1024, 1024
          %92 = vsyncadd %s85, %s91
          %s93 = smul.addr %s89, 4
          %s94 = smul.addr %s93, 128
          %s95 = scalar_lea.hbm %s0, %s94
          %s96 = sshll.u32 %s88, 4
          %s97 = int_to_ptr.vmem [resolvable:$true] %s96
          %102 = dma.hbm_to_vmem [thread:$0]  %s95, 1024, %s97, %s85, 128, 128, 8
        $region20: #{tpu_custom_call.1} parent=15 // pred_fallthru
          _
      $region16: #{tpu_custom_call.1} parent=5 // pred_fallthru
        _
      %p103 = scmp.le.s32.totalorder 1, %s10
      %p104 = scmp.lt.s32.totalorder %s10, 5
      %p105 = pnand %p103, %p104
      %p106 = pneg %p105
      // Predicated region
      $region21: #{tpu_custom_call.1} parent=5 // pred_check
        _
      $region22: #{tpu_custom_call.1} parent=5 // pred_check_branch
        %108 = sbr.rel (%p105) target = $region24
      $region23: #{tpu_custom_call.1} parent=5 // pred_region
        %s109 = ssub.s32 %s10, 1
        %s110 = sand.u32 %s23, 1
        %s111 = scalar_lea.sflag [#allocation3], %s110
        %s112 = sand.u32 %s23, 1
        %s113 = smul.addr %s112, 64
        %s114 = scalar_lea.vmem [#allocation2], %s113
        // Predicated region
        $region25: #{tpu_custom_call.1} parent=23 // pred_check
          %p115 = pneg %p36
        $region26: #{tpu_custom_call.1} parent=23 // pred_check_branch
          %117 = sbr.rel (%p115) target = $region28
        $region27: #{tpu_custom_call.1} parent=23 // pred_region
          %118 = dma.done %s111, 1024
        $region28: #{tpu_custom_call.1} parent=23 // pred_fallthru
          _
        %s119 = sand.u32 %s23, 1
        %s120 = scalar_lea.sflag [#allocation3], %s119
        %s121 = sand.u32 %s23, 1
        %s122 = smul.addr %s121, 64
        %s123 = scalar_lea.vmem [#allocation2], %s122
        %p124 = pneg %p36
        %p125 = pneg %p33
        %p126 = pneg %p62
        %p127 = pneg %p59
        %s128 = smul.u32 2, %s15
        %p129 = scmp.lt.s32.totalorder %s128, 7
        %s130 = scalar_select %p129, %s128, 7
        %s131 = smul.addr %s130, 4
        %s132 = smul.addr %s131, 8
        %s133 = scalar_lea.vmem %s1, %s132
        %s134 = smul.u32 2, %s15
        %s135 = smul.u32 2, %s15
        %p136 = scmp.lt.s32.totalorder %s135, 7
        %s137 = scalar_select %p136, %s135, 7
        %s138 = smul.addr %s137, 4
        %s139 = smul.addr %s138, 8
        %s140 = scalar_lea.vmem %s1, %s139
        %s141 = smul.u32 2, %s15
        %v142 = vld [vmem:[%s114] sm:$0xff]
        %v143 = vld [vmem:[%s114 + $0x8] sm:$0xff]
        %v144 = vld [vmem:[%s114 + $0x10] sm:$0xff]
        %v145 = vld [vmem:[%s114 + $0x18] sm:$0xf]
        %v146 = vld [vmem:[%s114 + $0x20] sm:$0xff]
        %v147 = vld [vmem:[%s114 + $0x28] sm:$0xff]
        %v148 = vld [vmem:[%s114 + $0x30] sm:$0xff]
        %v149 = vld [vmem:[%s114 + $0x38] sm:$0xf]
        %vm150 = vcmask 228352
        %151 = vst.msk [vmem:[%s140] sm:$0xff] %vm150, %v142
        %152 = vst.msk [vmem:[%s140 + $0x8] sm:$0xff] %vm150, %v143
        %153 = vst.msk [vmem:[%s140 + $0x10] sm:$0xff] %vm150, %v144
        %vm154 = vcmask 224256
        %155 = vst.msk [vmem:[%s140 + $0x18] sm:$0xf] %vm154, %v145
        %156 = vst.msk [vmem:[%s140 + $0x20] sm:$0xff] %vm150, %v146
        %157 = vst.msk [vmem:[%s140 + $0x28] sm:$0xff] %vm150, %v147
        %158 = vst.msk [vmem:[%s140 + $0x30] sm:$0xff] %vm150, %v148
        %159 = vst.msk [vmem:[%s140 + $0x38] sm:$0xf] %vm154, %v149
        %s160 = smul.u32 2, %s15
        %p161 = scmp.lt.s32.totalorder %s160, 7
        %s162 = scalar_select %p161, %s160, 7
        %s163 = smul.addr %s162, 4
        %s164 = smul.addr %s163, 8
        %s165 = scalar_lea.vmem %s1, %s164
        // Predicated region
        $region29: #{tpu_custom_call.1} parent=23 // pred_check
          %p166 = pneg %p59
        $region30: #{tpu_custom_call.1} parent=23 // pred_check_branch
          %168 = sbr.rel (%p166) target = $region32
        $region31: #{tpu_custom_call.1} parent=23 // pred_region
          %s169 = smul.u32 2, %s15
        $region32: #{tpu_custom_call.1} parent=23 // pred_fallthru
          _
      $region24: #{tpu_custom_call.1} parent=5 // pred_fallthru
        _
      %p170 = scmp.le.s32.totalorder 2, %s10
      // Predicated region
      $region33: #{tpu_custom_call.1} parent=5 // pred_check
        %p171 = pneg %p170
      $region34: #{tpu_custom_call.1} parent=5 // pred_check_branch
        %173 = sbr.rel (%p171) target = $region36
      $region35: #{tpu_custom_call.1} parent=5 // pred_region
        %s174 = ssub.s32 %s10, 2
        // Predicated region
        $region37: #{tpu_custom_call.1} parent=35 // pred_check
          %p175 = pneg %p65
        $region38: #{tpu_custom_call.1} parent=35 // pred_check_branch
          %177 = sbr.rel (%p175) target = $region40
        $region39: #{tpu_custom_call.1} parent=35 // pred_region
          %s178 = smul.u32 2, %s16
          %p179 = scmp.lt.s32.totalorder %s178, 7
          %s180 = scalar_select %p179, %s178, 7
          %s181 = smul.addr %s180, 4
          %s182 = smul.addr %s181, 8
          %s183 = scalar_lea.vmem %s1, %s182
        $region40: #{tpu_custom_call.1} parent=35 // pred_fallthru
          _
      $region36: #{tpu_custom_call.1} parent=5 // pred_fallthru
        _
    $region6: #{tpu_custom_call.1} parent=1 // loop_footer
      %s14 = sadd.s32 1, %s10
    $region7: #{tpu_custom_call.1} parent=1 // loop_footer_branch
      %9 = sbr.rel target = $region3
    $region8: #{tpu_custom_call.1} parent=1 // loop_exit
      _
    %184 = vsyncpa [#allocation3], 1
    %s185 = scalar_lea.sflag [#allocation3], 1
    %186 = vsyncpa %s185, 1

</llo_original>
